<compile_context>
chip_gen: v6e
topology: v6e:2x2x1
jax: 0.10.0
libtpu: 0.0.40
codegen_flags: <defaults>
</compile_context>

<pallas_src>
import functools

import jax
import jax.numpy as jnp
from jax import lax
from jax.experimental import pallas as pl
from jax.experimental.pallas import tpu as pltpu

NEG_INF = -1.0e12        # matches the PyTorch -1000000000000.0 fill
LEAKY_SLOPE = 0.01       # nn.LeakyReLU() default
_MAX_TN = 512            # N rows streamed per grid step (upper bound)


def _attn_node_kernel(x_ref, mask_ref, cen_ref, wa1_ref, wa2_ref, o_ref,
                      m_sc, l_sc, acc_sc, *, n_total):
    kn = pl.program_id(1)

    @pl.when(kn == 0)
    def _init():
        m_sc[...] = jnp.full_like(m_sc, -jnp.inf)
        l_sc[...] = jnp.zeros_like(l_sc)
        acc_sc[...] = jnp.zeros_like(acc_sc)

    x = x_ref[...]                          # (TB, TN, Fin) f32
    mask = mask_ref[...]                    # (TB, TN, 1)   f32 == A[:, :, :1]
    wa1 = wa1_ref[...]                      # (1, 1, Fin)   == (W @ a1)^T
    wa2 = wa2_ref[...]                      # (1, 1, Fin)   == (W @ a2)^T

    tb, tn, _ = x.shape
    needs_tail_mask = (n_total % tn) != 0   # static (trace-time) decision
    if needs_tail_mask:
        rows = kn * tn + lax.broadcasted_iota(jnp.int32, (tb, tn, 1), 1)
        valid = rows < n_total
        # Scrub OOB-padded rows (contents are unspecified, possibly NaN).
        x = jnp.where(valid, x, 0.0)

    # attention logits: e = LeakyReLU( x . (W a1) + centernode . (W a2) )
    c = jnp.sum(cen_ref[...] * wa2, axis=-1, keepdims=True)      # (TB, 1, 1)
    s = jnp.sum(x * wa1, axis=-1, keepdims=True) + c             # (TB, TN, 1)
    e = jnp.where(s >= 0, s, LEAKY_SLOPE * s)                    # LeakyReLU
    e = jnp.where(mask > 0, e, NEG_INF)                          # edge mask
    if needs_tail_mask:
        e = jnp.where(valid, e, -jnp.inf)                        # drop padded rows

    # streaming (online) softmax over the N axis
    m_prev = m_sc[...]
    m_new = jnp.maximum(m_prev, jnp.max(e, axis=1, keepdims=True))   # (TB,1,1)
    alpha = jnp.exp(m_prev - m_new)
    p = jnp.exp(e - m_new)                                           # (TB,TN,1)
    l_sc[...] = alpha * l_sc[...] + jnp.sum(p, axis=1, keepdims=True)
    acc_sc[...] = alpha * acc_sc[...] + jnp.sum(p * x, axis=1, keepdims=True)
    m_sc[...] = m_new

    @pl.when(kn == pl.num_programs(1) - 1)
    def _finalize():
        # Deferred normalization: one divide per (TB,1,Fin) output block, off
        # the per-N hot path.  (pl.reciprocal(approx=True) is a free EUP slot
        # if ~1e-3 tolerance is acceptable; kept exact to match the reference.)
        o_ref[...] = (acc_sc[...] / l_sc[...]).astype(o_ref.dtype)


def _vmem_capacity_bytes():
    try:
        return int(pltpu.get_tpu_info().vmem_capacity_bytes)
    except Exception:
        return 64 * 1024 * 1024          # v7x-safe fallback


def _choose_tiles(B, N, Fin, tile_budget_bytes, tb=None, tn=None):
    """Pick (TB, TN) so double-buffered X blocks stay inside the VMEM budget."""
    if tn is None:
        tn = N if N <= _MAX_TN else _MAX_TN
        if tn != N:
            tn = max(8, (tn // 8) * 8)             # (8,128) sublane rule
    if tb is None:
        x_block_bytes = tn * Fin * 4               # f32 X tile per batch row
        tb = max(1, tile_budget_bytes // (4 * x_block_bytes))  # 2 bufs + headroom
        tb = min(tb, B)
        # Keep >= 2 grid steps so v7x's second TensorCore gets work.
        if tb >= B and B > 1 and pl.cdiv(N, tn) < 2:
            tb = max(1, B // 2)
    return min(tb, B), min(tn, N)


def single_attention_node(X, A, centernode, W, a, *, tb=None, tn=None):
    """X:(B,N,Fin), A:(B,N,M), centernode:(B,1,Fin), W:(Fin,Fout), a:(2*Fout,1)."""
    B, N, Fin = X.shape
    Fout = W.shape[1]
    assert A.shape[0] == B and A.shape[1] == N
    assert centernode.shape == (B, 1, Fin)
    assert a.shape == (2 * Fout, 1)

    # One-off parameter folds (O(Fin*Fout)); no per-batch work in the wrapper.
    #   [H | centerH] @ a == X @ (W @ a1) + centernode @ (W @ a2)
    wa1 = jnp.matmul(W, a[:Fout]).reshape(1, 1, Fin).astype(jnp.float32)
    wa2 = jnp.matmul(W, a[Fout:]).reshape(1, 1, Fin).astype(jnp.float32)
    edge_mask = A[:, :, 0:1]                       # only column 0 of A is used

    # Per-generation VMEM budget (64 MiB v7x / 128 MiB v5e-v6e) and tile sizing.
    vmem_cap = _vmem_capacity_bytes()
    vmem_limit = int(min(vmem_cap * 3 // 4, 100 * 1024 * 1024))
    tb, tn = _choose_tiles(B, N, Fin, vmem_limit // 2, tb, tn)

    grid = (pl.cdiv(B, tb), pl.cdiv(N, tn))
    kernel = functools.partial(_attn_node_kernel, n_total=N)

    return pl.pallas_call(
        kernel,
        out_shape=jax.ShapeDtypeStruct((B, 1, Fin), jnp.float32),
        grid_spec=pltpu.PrefetchScalarGridSpec(
            num_scalar_prefetch=0,
            grid=grid,
            in_specs=[
                pl.BlockSpec((tb, tn, Fin), lambda b, n: (b, n, 0)),   # X
                pl.BlockSpec((tb, tn, 1), lambda b, n: (b, n, 0)),     # edge mask
                pl.BlockSpec((tb, 1, Fin), lambda b, n: (b, 0, 0)),    # centernode
                pl.BlockSpec((1, 1, Fin), lambda b, n: (0, 0, 0)),     # W @ a1 (shared)
                pl.BlockSpec((1, 1, Fin), lambda b, n: (0, 0, 0)),     # W @ a2 (shared)
            ],
            out_specs=pl.BlockSpec((tb, 1, Fin), lambda b, n: (b, 0, 0)),
            scratch_shapes=[
                pltpu.VMEM((tb, 1, 1), jnp.float32),     # running max  m
                pltpu.VMEM((tb, 1, 1), jnp.float32),     # running sum  l
                pltpu.VMEM((tb, 1, Fin), jnp.float32),   # running acc  sum(p*x)
            ],
        ),
        compiler_params=pltpu.CompilerParams(
            dimension_semantics=("parallel", "arbitrary"),
            vmem_limit_bytes=vmem_limit,
        ),
    )(X, edge_mask, centernode, wa1, wa2)


def single_attention_node_ref(X, A, centernode, W, a, negative_slope=LEAKY_SLOPE):
    """Pure-JAX reference mirroring the PyTorch module line by line."""
    H = jnp.matmul(X, W)                                    # (B, N, Fout)
    centerH = jnp.matmul(centernode, W)                     # (B, 1, Fout)
    B, N, _ = A.shape
    Fout = W.shape[1]
    edge_mask = A[:, :, :1]                                 # (B, N, 1)
    a_input = jnp.concatenate(
        [H, jnp.tile(centerH, (1, N, 1))], axis=-1).reshape(B, N, -1, 2 * Fout)
    e = jnp.matmul(a_input, a)[..., 0]                      # squeeze(3) -> (B, N, 1)
    e = jnp.where(e >= 0, e, negative_slope * e)            # LeakyReLU
    zero_vec = NEG_INF * jnp.ones_like(e)
    attention = jnp.where(edge_mask > 0, e, zero_vec)
    attention = jax.nn.softmax(attention, axis=1)
    h_prime = jnp.matmul(jnp.swapaxes(attention, -1, -2), X)
    return h_prime


if __name__ == "__main__":
    key = jax.random.PRNGKey(0)
    kx, ka, kc, kw, kav, kx2, ka2, kc2 = jax.random.split(key, 8)

    B, N, M = 2, 16, 8
    in_features = out_features = 256      # module defaults; lane-dense output

    X = jax.random.normal(kx, (B, N, in_features), dtype=jnp.float32)
    A = (jax.random.uniform(ka, (B, N, M)) > 0.5).astype(jnp.float32)
    centernode = jax.random.normal(kc, (B, 1, in_features), dtype=jnp.float32)

    # xavier_uniform_(gain=1.414) parameter init, like the PyTorch module.
    gain = 1.414
    lim_w = gain * (6.0 / (in_features + out_features)) ** 0.5
    lim_a = gain * (6.0 / (2 * out_features + 1)) ** 0.5
    W = jax.random.uniform(kw, (in_features, out_features), jnp.float32, -lim_w, lim_w)
    a = jax.random.uniform(kav, (2 * out_features, 1), jnp.float32, -lim_a, lim_a)

    ref = single_attention_node_ref(X, A, centernode, W, a)

    # 1) default auto-tiled path (single N block, batch tiled, 'parallel' B axis)
    out = jax.block_until_ready(single_attention_node(X, A, centernode, W, a))
    assert out.shape == (B, 1, in_features), out.shape
    assert jnp.allclose(out, ref, rtol=1e-4, atol=1e-4), \
        ("max abs err", float(jnp.max(jnp.abs(out - ref))))

    # 2) streaming-N path: multiple online-softmax steps along the 'arbitrary' axis
    out2 = jax.block_until_ready(single_attention_node(X, A, centernode, W, a, tn=8))
    assert jnp.allclose(out2, ref, rtol=1e-4, atol=1e-4), \
        ("max abs err", float(jnp.max(jnp.abs(out2 - ref))))

    # 3) ragged N (N % TN != 0) — exercises the padded-tail masking
    N2 = 20
    X2 = jax.random.normal(kx2, (B, N2, in_features), dtype=jnp.float32)
    A2 = (jax.random.uniform(ka2, (B, N2, M)) > 0.5).astype(jnp.float32)
    cn2 = jax.random.normal(kc2, (B, 1, in_features), dtype=jnp.float32)
    out3 = jax.block_until_ready(single_attention_node(X2, A2, cn2, W, a, tn=8))
    ref3 = single_attention_node_ref(X2, A2, cn2, W, a)
    assert jnp.allclose(out3, ref3, rtol=1e-4, atol=1e-4), \
        ("max abs err", float(jnp.max(jnp.abs(out3 - ref3))))

    print("KERNEL_OK")
</pallas_src>

<mosaic_0001>
module attributes {stable_mosaic.version = 11 : i64} {
  func.func @_attn_node_kernel(%arg0: i32, %arg1: i32, %arg2: memref<1x16x256xf32, #tpu.memory_space<vmem>>, %arg3: memref<1x16x1xf32, #tpu.memory_space<vmem>>, %arg4: memref<1x1x256xf32, #tpu.memory_space<vmem>>, %arg5: memref<1x1x256xf32, #tpu.memory_space<vmem>>, %arg6: memref<1x1x256xf32, #tpu.memory_space<vmem>>, %arg7: memref<1x1x256xf32, #tpu.memory_space<vmem>>, %arg8: memref<1x1x1xf32, #tpu.memory_space<vmem>>, %arg9: memref<1x1x1xf32, #tpu.memory_space<vmem>>, %arg10: memref<1x1x256xf32, #tpu.memory_space<vmem>>) attributes {dimension_semantics = [#tpu.dimension_semantics<parallel>, #tpu.dimension_semantics<arbitrary>], iteration_bounds = array<i64: 2, 1>, scalar_prefetch = 0 : i64, scratch_operands = 3 : i64, tpu.core_type = #tpu.core_type<tc>, window_params = [{transform_indices = @transform_0, window_bounds = array<i64: 1, 16, 256>}, {transform_indices = @transform_1, window_bounds = array<i64: 1, 16, 1>}, {transform_indices = @transform_2, window_bounds = array<i64: 1, 1, 256>}, {pipeline_mode = #tpu.pipeline_mode<synchronous>, transform_indices = @transform_3, window_bounds = array<i64: 1, 1, 256>}, {pipeline_mode = #tpu.pipeline_mode<synchronous>, transform_indices = @transform_4, window_bounds = array<i64: 1, 1, 256>}, {transform_indices = @transform_5, window_bounds = array<i64: 1, 1, 256>}]} {
    %c0_i32 = arith.constant 0 : i32
    %0 = arith.cmpi eq, %arg1, %c0_i32 : i32
    %1 = arith.extui %0 : i1 to i32
    %c0_i32_0 = arith.constant 0 : i32
    %2 = arith.cmpi ne, %1, %c0_i32_0 : i32
    scf.if %2 {
      %cst_43 = arith.constant 0xFF800000 : f32
      %54 = vector.broadcast %cst_43 : f32 to vector<1x1x1xf32>
      %c0_44 = arith.constant 0 : index
      %c0_45 = arith.constant 0 : index
      %c0_46 = arith.constant 0 : index
      %55 = vector.load %arg8[%c0_44, %c0_45, %c0_46] : memref<1x1x1xf32, #tpu.memory_space<vmem>>, vector<1x1x1xf32>
      tpu.vector_store %arg8[%c0_44, %c0_45, %c0_46], %54 {strides = array<i32>} : memref<1x1x1xf32, #tpu.memory_space<vmem>>, vector<1x1x1xf32>,
      %cst_47 = arith.constant 0.000000e+00 : f32
      %56 = vector.broadcast %cst_47 : f32 to vector<1x1x1xf32>
      %c0_48 = arith.constant 0 : index
      %c0_49 = arith.constant 0 : index
      %c0_50 = arith.constant 0 : index
      %57 = vector.load %arg9[%c0_48, %c0_49, %c0_50] : memref<1x1x1xf32, #tpu.memory_space<vmem>>, vector<1x1x1xf32>
      tpu.vector_store %arg9[%c0_48, %c0_49, %c0_50], %56 {strides = array<i32>} : memref<1x1x1xf32, #tpu.memory_space<vmem>>, vector<1x1x1xf32>,
      %cst_51 = arith.constant 0.000000e+00 : f32
      %58 = vector.broadcast %cst_51 : f32 to vector<1x1x256xf32>
      %c0_52 = arith.constant 0 : index
      %c0_53 = arith.constant 0 : index
      %c0_54 = arith.constant 0 : index
      %59 = vector.load %arg10[%c0_52, %c0_53, %c0_54] : memref<1x1x256xf32, #tpu.memory_space<vmem>>, vector<1x1x256xf32>
      tpu.vector_store %arg10[%c0_52, %c0_53, %c0_54], %58 {strides = array<i32>} : memref<1x1x256xf32, #tpu.memory_space<vmem>>, vector<1x1x256xf32>,
    } else {
    }
    %c0 = arith.constant 0 : index
    %c0_1 = arith.constant 0 : index
    %c0_2 = arith.constant 0 : index
    %3 = vector.load %arg2[%c0, %c0_1, %c0_2] : memref<1x16x256xf32, #tpu.memory_space<vmem>>, vector<1x16x256xf32>
    %c0_3 = arith.constant 0 : index
    %c0_4 = arith.constant 0 : index
    %c0_5 = arith.constant 0 : index
    %4 = vector.load %arg3[%c0_3, %c0_4, %c0_5] : memref<1x16x1xf32, #tpu.memory_space<vmem>>, vector<1x16x1xf32>
    %c0_6 = arith.constant 0 : index
    %c0_7 = arith.constant 0 : index
    %c0_8 = arith.constant 0 : index
    %5 = vector.load %arg5[%c0_6, %c0_7, %c0_8] : memref<1x1x256xf32, #tpu.memory_space<vmem>>, vector<1x1x256xf32>
    %c0_9 = arith.constant 0 : index
    %c0_10 = arith.constant 0 : index
    %c0_11 = arith.constant 0 : index
    %6 = vector.load %arg6[%c0_9, %c0_10, %c0_11] : memref<1x1x256xf32, #tpu.memory_space<vmem>>, vector<1x1x256xf32>
    %c0_12 = arith.constant 0 : index
    %c0_13 = arith.constant 0 : index
    %c0_14 = arith.constant 0 : index
    %7 = vector.load %arg4[%c0_12, %c0_13, %c0_14] : memref<1x1x256xf32, #tpu.memory_space<vmem>>, vector<1x1x256xf32>
    %8 = arith.mulf %7, %6 : vector<1x1x256xf32>
    %cst = arith.constant dense<0.000000e+00> : vector<1x1xf32>
    %9 = vector.multi_reduction <add>, %8, %cst [2] : vector<1x1x256xf32> to vector<1x1xf32>
    %10 = vector.shape_cast %9 : vector<1x1xf32> to vector<1x1x1xf32>
    %11 = vector.broadcast %5 : vector<1x1x256xf32> to vector<1x16x256xf32>
    %12 = arith.mulf %3, %11 : vector<1x16x256xf32>
    %cst_15 = arith.constant dense<0.000000e+00> : vector<1x16xf32>
    %13 = vector.multi_reduction <add>, %12, %cst_15 [2] : vector<1x16x256xf32> to vector<1x16xf32>
    %14 = vector.shape_cast %13 : vector<1x16xf32> to vector<1x16x1xf32>
    %15 = vector.broadcast %10 : vector<1x1x1xf32> to vector<1x16x1xf32>
    %16 = arith.addf %14, %15 : vector<1x16x1xf32>
    %cst_16 = arith.constant 0.000000e+00 : f32
    %17 = vector.broadcast %cst_16 : f32 to vector<1x16x1xf32>
    %18 = arith.cmpf oge, %16, %17 : vector<1x16x1xf32>
    %cst_17 = arith.constant 0.00999999977 : f32
    %19 = vector.broadcast %cst_17 : f32 to vector<1x16x1xf32>
    %20 = arith.mulf %19, %16 : vector<1x16x1xf32>
    %21 = arith.select %18, %16, %20 : vector<1x16x1xi1>, vector<1x16x1xf32>
    %cst_18 = arith.constant 0.000000e+00 : f32
    %22 = vector.broadcast %cst_18 : f32 to vector<1x16x1xf32>
    %23 = arith.cmpf ogt, %4, %22 : vector<1x16x1xf32>
    %cst_19 = arith.constant -9.99999995E+11 : f32
    %24 = vector.broadcast %cst_19 : f32 to vector<1x16x1xf32>
    %25 = arith.select %23, %21, %24 : vector<1x16x1xi1>, vector<1x16x1xf32>
    %c0_20 = arith.constant 0 : index
    %c0_21 = arith.constant 0 : index
    %c0_22 = arith.constant 0 : index
    %26 = vector.load %arg8[%c0_20, %c0_21, %c0_22] : memref<1x1x1xf32, #tpu.memory_space<vmem>>, vector<1x1x1xf32>
    %cst_23 = arith.constant dense<0xFF800000> : vector<1x1xf32>
    %27 = vector.multi_reduction <maximumf>, %25, %cst_23 [1] : vector<1x16x1xf32> to vector<1x1xf32>
    %28 = vector.shape_cast %27 : vector<1x1xf32> to vector<1x1x1xf32>
    %29 = arith.maximumf %26, %28 : vector<1x1x1xf32>
    %30 = arith.subf %26, %29 : vector<1x1x1xf32>
    %31 = math.exp %30 : vector<1x1x1xf32>
    %32 = vector.broadcast %29 : vector<1x1x1xf32> to vector<1x16x1xf32>
    %33 = arith.subf %25, %32 : vector<1x16x1xf32>
    %34 = math.exp %33 : vector<1x16x1xf32>
    %c0_24 = arith.constant 0 : index
    %c0_25 = arith.constant 0 : index
    %c0_26 = arith.constant 0 : index
    %35 = vector.load %arg9[%c0_24, %c0_25, %c0_26] : memref<1x1x1xf32, #tpu.memory_space<vmem>>, vector<1x1x1xf32>
    %36 = arith.mulf %31, %35 : vector<1x1x1xf32>
    %cst_27 = arith.constant dense<0.000000e+00> : vector<1x1xf32>
    %37 = vector.multi_reduction <add>, %34, %cst_27 [1] : vector<1x16x1xf32> to vector<1x1xf32>
    %38 = vector.shape_cast %37 : vector<1x1xf32> to vector<1x1x1xf32>
    %39 = arith.addf %36, %38 : vector<1x1x1xf32>
    %c0_28 = arith.constant 0 : index
    %c0_29 = arith.constant 0 : index
    %c0_30 = arith.constant 0 : index
    %40 = vector.load %arg9[%c0_28, %c0_29, %c0_30] : memref<1x1x1xf32, #tpu.memory_space<vmem>>, vector<1x1x1xf32>
    tpu.vector_store %arg9[%c0_28, %c0_29, %c0_30], %39 {strides = array<i32>} : memref<1x1x1xf32, #tpu.memory_space<vmem>>, vector<1x1x1xf32>,
    %c0_31 = arith.constant 0 : index
    %c0_32 = arith.constant 0 : index
    %c0_33 = arith.constant 0 : index
    %41 = vector.load %arg10[%c0_31, %c0_32, %c0_33] : memref<1x1x256xf32, #tpu.memory_space<vmem>>, vector<1x1x256xf32>
    %42 = vector.broadcast %31 : vector<1x1x1xf32> to vector<1x1x256xf32>
    %43 = arith.mulf %42, %41 : vector<1x1x256xf32>
    %44 = vector.broadcast %34 : vector<1x16x1xf32> to vector<1x16x256xf32>
    %45 = arith.mulf %44, %3 : vector<1x16x256xf32>
    %cst_34 = arith.constant dense<0.000000e+00> : vector<1x256xf32>
    %46 = vector.multi_reduction <add>, %45, %cst_34 [1] : vector<1x16x256xf32> to vector<1x256xf32>
    %47 = vector.shape_cast %46 : vector<1x256xf32> to vector<1x1x256xf32>
    %48 = arith.addf %43, %47 : vector<1x1x256xf32>
    %c0_35 = arith.constant 0 : index
    %c0_36 = arith.constant 0 : index
    %c0_37 = arith.constant 0 : index
    %49 = vector.load %arg10[%c0_35, %c0_36, %c0_37] : memref<1x1x256xf32, #tpu.memory_space<vmem>>, vector<1x1x256xf32>
    tpu.vector_store %arg10[%c0_35, %c0_36, %c0_37], %48 {strides = array<i32>} : memref<1x1x256xf32, #tpu.memory_space<vmem>>, vector<1x1x256xf32>,
    %c0_38 = arith.constant 0 : index
    %c0_39 = arith.constant 0 : index
    %c0_40 = arith.constant 0 : index
    %50 = vector.load %arg8[%c0_38, %c0_39, %c0_40] : memref<1x1x1xf32, #tpu.memory_space<vmem>>, vector<1x1x1xf32>
    tpu.vector_store %arg8[%c0_38, %c0_39, %c0_40], %29 {strides = array<i32>} : memref<1x1x1xf32, #tpu.memory_space<vmem>>, vector<1x1x1xf32>,
    %c0_i32_41 = arith.constant 0 : i32
    %51 = arith.cmpi eq, %arg1, %c0_i32_41 : i32
    %52 = arith.extui %51 : i1 to i32
    %c0_i32_42 = arith.constant 0 : i32
    %53 = arith.cmpi ne, %52, %c0_i32_42 : i32
    scf.if %53 {
      %c0_43 = arith.constant 0 : index
      %c0_44 = arith.constant 0 : index
      %c0_45 = arith.constant 0 : index
      %54 = vector.load %arg10[%c0_43, %c0_44, %c0_45] : memref<1x1x256xf32, #tpu.memory_space<vmem>>, vector<1x1x256xf32>
      %c0_46 = arith.constant 0 : index
      %c0_47 = arith.constant 0 : index
      %c0_48 = arith.constant 0 : index
      %55 = vector.load %arg9[%c0_46, %c0_47, %c0_48] : memref<1x1x1xf32, #tpu.memory_space<vmem>>, vector<1x1x1xf32>
      %56 = vector.broadcast %55 : vector<1x1x1xf32> to vector<1x1x256xf32>
      %57 = arith.divf %54, %56 : vector<1x1x256xf32>
      %c0_49 = arith.constant 0 : index
      %c0_50 = arith.constant 0 : index
      %c0_51 = arith.constant 0 : index
      %58 = vector.load %arg7[%c0_49, %c0_50, %c0_51] : memref<1x1x256xf32, #tpu.memory_space<vmem>>, vector<1x1x256xf32>
      tpu.vector_store %arg7[%c0_49, %c0_50, %c0_51], %57 {strides = array<i32>} : memref<1x1x256xf32, #tpu.memory_space<vmem>>, vector<1x1x256xf32>,
    } else {
    }
    return
  }
  func.func @transform_0(%arg0: i32, %arg1: i32) -> (i32, i32, i32) {
    %c0_i32 = arith.constant 0 : i32
    %c0_i32_0 = arith.constant 0 : i32
    return %arg0, %arg1, %c0_i32 : i32, i32, i32
  }
  func.func @transform_1(%arg0: i32, %arg1: i32) -> (i32, i32, i32) {
    %c0_i32 = arith.constant 0 : i32
    %c0_i32_0 = arith.constant 0 : i32
    return %arg0, %arg1, %c0_i32 : i32, i32, i32
  }
  func.func @transform_2(%arg0: i32, %arg1: i32) -> (i32, i32, i32) {
    %c0_i32 = arith.constant 0 : i32
    %c0_i32_0 = arith.constant 0 : i32
    %c0_i32_1 = arith.constant 0 : i32
    return %arg0, %c0_i32, %c0_i32_0 : i32, i32, i32
  }
  func.func @transform_3(%arg0: i32, %arg1: i32) -> (i32, i32, i32) {
    %c0_i32 = arith.constant 0 : i32
    %c0_i32_0 = arith.constant 0 : i32
    %c0_i32_1 = arith.constant 0 : i32
    %c0_i32_2 = arith.constant 0 : i32
    return %c0_i32, %c0_i32_0, %c0_i32_1 : i32, i32, i32
  }
  func.func @transform_4(%arg0: i32, %arg1: i32) -> (i32, i32, i32) {
    %c0_i32 = arith.constant 0 : i32
    %c0_i32_0 = arith.constant 0 : i32
    %c0_i32_1 = arith.constant 0 : i32
    %c0_i32_2 = arith.constant 0 : i32
    return %c0_i32, %c0_i32_0, %c0_i32_1 : i32, i32, i32
  }
  func.func @transform_5(%arg0: i32, %arg1: i32) -> (i32, i32, i32) {
    %c0_i32 = arith.constant 0 : i32
    %c0_i32_0 = arith.constant 0 : i32
    %c0_i32_1 = arith.constant 0 : i32
    return %arg0, %c0_i32, %c0_i32_0 : i32, i32, i32
  }
}

</mosaic_0001>

<llo_original>
// kernel: tpu_custom_call.1
$region0: #{tpu_custom_call.1}
  #allocation0 [shape = 'u32[]', space=smem, size = 0x4, offset = 0x4, fixed_abs, tag = 'smem constant byte address 0x4 - core index']
  #allocation1 [shape = 'u32[144,128]{1,0:T(1,128)}', space=vmem, size = 0x12000, scoped, tag = 'internal scratch']
  #allocation2 [shape = 'f32[1,1,1]{2,1,0:T(1,128)}', space=vmem, size = 0x200, scoped, tag = 'scratch operand']
  #allocation3 [shape = 'f32[1,1,1]{2,1,0:T(1,128)}', space=vmem, size = 0x200, scoped, tag = 'scratch operand']
  #allocation4 [shape = 'f32[1,1,256]{2,1,0:T(1,128)}', space=vmem, size = 0x400, scoped, tag = 'scratch operand']
  %s0 = inlined_call_operand.hbm [shape: f32[2,16,256], index: 0, kind: input, shape index: {}]
  %s1 = inlined_call_operand.vmem [shape: f32[2,16,1], index: 1, kind: input, shape index: {}]
  %s2 = inlined_call_operand.vmem [shape: f32[2,1,256], index: 2, kind: input, shape index: {}]
  %s3 = inlined_call_operand.vmem [shape: f32[1,1,256], index: 3, kind: input, shape index: {}]
  %s4 = inlined_call_operand.vmem [shape: f32[1,1,256], index: 4, kind: input, shape index: {}]
  %s5 = inlined_call_operand.hbm [shape: f32[2,1,256], index: 5, kind: output, shape index: {}]
  %s6 = sld [smem:[#allocation0]]
  $region65: #{tpu_custom_call.1} parent=0
    _
  %s8 = ssub.s32 1, %s6
  %s9 = scalar_select 0, %s8, %s6
  $region1: #{tpu_custom_call.1} parent=0
    #allocation5 [shape = 'u8[32768]{0}', space=vmem, size = 0x8000, scoped, tag = 'input window, operand 0']
    #allocation6 [shape = 's32[2]{0}', space=sflag, size = 0x8, scoped, tag = 'scoped memory for tpu_custom_call.1']
    #allocation7 [shape = 's32[2]{0}', space=sflag, size = 0x8, scoped, tag = 'scoped memory for tpu_custom_call.1']
    #allocation8 [shape = 'u8[2048]{0}', space=vmem, size = 0x800, scoped, tag = 'output window, operand 0']
    %10 = vsyncpa [#allocation6], 0
    %s11 = scalar_lea.sflag [#allocation6], 1
    %12 = vsyncpa %s11, 0
    %13 = vsyncpa [#allocation7], 0
    %s14 = scalar_lea.sflag [#allocation7], 1
    %15 = vsyncpa %s14, 0
    loop: start=0, step=1, limit=4
    $region2: #{tpu_custom_call.1} parent=1 // loop_pre_header
      _
    $region3: #{tpu_custom_call.1} parent=1 // loop_header
      %s17 = sphi 0, %s21
      %p18 = scmp.ge.s32.totalorder %s17, 4
      %s24 = sphi 0, %s36
      %s25 = sphi 0, %s32
      %s26 = sphi 0, %s24
      %s27 = sphi 0, %s25
      %s28 = sphi 0, %s26
      %s29 = sphi 0, %s27
      %s41 = sphi 0, %s43
      %s44 = sphi 0, %s41
      %s45 = sphi 0, %s44
      %s61 = sphi 0, %s45
      %s69 = sphi 0, %s71
      %s72 = sphi 0, %s69
      %s73 = sphi 0, %s72
      %s89 = sphi 0, %s73
      %s95 = sphi 0, %s97
      %s98 = sphi 0, %s95
      %s99 = sphi 0, %s98
      %s115 = sphi 0, %s99
      %s119 = sphi 0, %s119
      %s121 = sphi 0, %s119
      %s122 = sphi 0, %s121
      %s136 = sphi 0, %s122
      %s140 = sphi 0, %s140
      %s142 = sphi 0, %s140
      %s143 = sphi 0, %s142
      %s157 = sphi 0, %s143
      %s163 = sphi 0, %s165
      %s166 = sphi 0, %s163
      %s167 = sphi 0, %s166
      %s183 = sphi 0, %s167
    $region4: #{tpu_custom_call.1} parent=1 // loop_header_branch
      %20 = sbr.rel (%p18) target = $region8
    $region5: #{tpu_custom_call.1} parent=1 // loop_body
      %s22 = ssub.s32 %s17, 1
      %s23 = ssub.s32 %s17, 2
      %s30 = sadd.s32 1, %s25
      %p31 = scmp.ge.s32.totalorder %s30, 1
      %s32 = scalar_select %p31, 0, %s30
      %s33 = sadd.s32 1, %s24
      %s34 = scalar_select %p31, %s33, %s24
      %p35 = scmp.ge.s32.totalorder %s34, 2
      %s36 = scalar_select %p35, 0, %s34
      %s37 = ssub.s32 %s24, %s36
      %s38 = ssub.s32 %s25, %s32
      %s39 = sor.u32 %s37, %s38
      %p40 = scmp.eq.s32.totalorder %s39, 0
      %s42 = sadd.s32 %s41, 1
      %s43 = scalar_select %p40, %s41, %s42
      %p46 = pneg %p40
      %p47 = scmp.eq.s32.totalorder %s17, 1
      %p48 = por %p46, %p47
      %p49 = scmp.ne.s32.totalorder %s41, %s44
      %p50 = scmp.eq.s32.totalorder %s17, 0
      %p51 = por %p49, %p50
      %p52 = scmp.ne.s32.totalorder %s41, %s44
      %p53 = scmp.eq.s32.totalorder %s22, 1
      %p54 = por %p52, %p53
      %p55 = scmp.ne.s32.totalorder %s44, %s45
      %p56 = scmp.eq.s32.totalorder %s22, 0
      %p57 = por %p55, %p56
      %p58 = scmp.ne.s32.totalorder %s44, %s45
      %p59 = scmp.eq.s32.totalorder %s23, 1
      %p60 = por %p58, %p59
      %p62 = scmp.ne.s32.totalorder %s45, %s61
      %p63 = scmp.eq.s32.totalorder %s23, 0
      %p64 = por %p62, %p63
      %s65 = ssub.s32 %s24, %s36
      %s66 = ssub.s32 %s25, %s32
      %s67 = sor.u32 %s65, %s66
      %p68 = scmp.eq.s32.totalorder %s67, 0
      %s70 = sadd.s32 %s69, 1
      %s71 = scalar_select %p68, %s69, %s70
      %p74 = pneg %p68
      %p75 = scmp.eq.s32.totalorder %s17, 1
      %p76 = por %p74, %p75
      %p77 = scmp.ne.s32.totalorder %s69, %s72
      %p78 = scmp.eq.s32.totalorder %s17, 0
      %p79 = por %p77, %p78
      %p80 = scmp.ne.s32.totalorder %s69, %s72
      %p81 = scmp.eq.s32.totalorder %s22, 1
      %p82 = por %p80, %p81
      %p83 = scmp.ne.s32.totalorder %s72, %s73
      %p84 = scmp.eq.s32.totalorder %s22, 0
      %p85 = por %p83, %p84
      %p86 = scmp.ne.s32.totalorder %s72, %s73
      %p87 = scmp.eq.s32.totalorder %s23, 1
      %p88 = por %p86, %p87
      %p90 = scmp.ne.s32.totalorder %s73, %s89
      %p91 = scmp.eq.s32.totalorder %s23, 0
      %p92 = por %p90, %p91
      %s93 = ssub.s32 %s24, %s36
      %p94 = scmp.eq.s32.totalorder %s93, 0
      %s96 = sadd.s32 %s95, 1
      %s97 = scalar_select %p94, %s95, %s96
      %p100 = pneg %p94
      %p101 = scmp.eq.s32.totalorder %s17, 1
      %p102 = por %p100, %p101
      %p103 = scmp.ne.s32.totalorder %s95, %s98
      %p104 = scmp.eq.s32.totalorder %s17, 0
      %p105 = por %p103, %p104
      %p106 = scmp.ne.s32.totalorder %s95, %s98
      %p107 = scmp.eq.s32.totalorder %s22, 1
      %p108 = por %p106, %p107
      %p109 = scmp.ne.s32.totalorder %s98, %s99
      %p110 = scmp.eq.s32.totalorder %s22, 0
      %p111 = por %p109, %p110
      %p112 = scmp.ne.s32.totalorder %s98, %s99
      %p113 = scmp.eq.s32.totalorder %s23, 1
      %p114 = por %p112, %p113
      %p116 = scmp.ne.s32.totalorder %s99, %s115
      %p117 = scmp.eq.s32.totalorder %s23, 0
      %p118 = por %p116, %p117
      %s120 = sadd.s32 %s119, 1
      %p123 = scmp.eq.s32.totalorder %s17, 1
      %p124 = scmp.ne.s32.totalorder %s119, %s121
      %p125 = scmp.eq.s32.totalorder %s17, 0
      %p126 = por %p124, %p125
      %p127 = scmp.ne.s32.totalorder %s119, %s121
      %p128 = scmp.eq.s32.totalorder %s22, 1
      %p129 = por %p127, %p128
      %p130 = scmp.ne.s32.totalorder %s121, %s122
      %p131 = scmp.eq.s32.totalorder %s22, 0
      %p132 = por %p130, %p131
      %p133 = scmp.ne.s32.totalorder %s121, %s122
      %p134 = scmp.eq.s32.totalorder %s23, 1
      %p135 = por %p133, %p134
      %p137 = scmp.ne.s32.totalorder %s122, %s136
      %p138 = scmp.eq.s32.totalorder %s23, 0
      %p139 = por %p137, %p138
      %s141 = sadd.s32 %s140, 1
      %p144 = scmp.eq.s32.totalorder %s17, 1
      %p145 = scmp.ne.s32.totalorder %s140, %s142
      %p146 = scmp.eq.s32.totalorder %s17, 0
      %p147 = por %p145, %p146
      %p148 = scmp.ne.s32.totalorder %s140, %s142
      %p149 = scmp.eq.s32.totalorder %s22, 1
      %p150 = por %p148, %p149
      %p151 = scmp.ne.s32.totalorder %s142, %s143
      %p152 = scmp.eq.s32.totalorder %s22, 0
      %p153 = por %p151, %p152
      %p154 = scmp.ne.s32.totalorder %s142, %s143
      %p155 = scmp.eq.s32.totalorder %s23, 1
      %p156 = por %p154, %p155
      %p158 = scmp.ne.s32.totalorder %s143, %s157
      %p159 = scmp.eq.s32.totalorder %s23, 0
      %p160 = por %p158, %p159
      %s161 = ssub.s32 %s24, %s36
      %p162 = scmp.eq.s32.totalorder %s161, 0
      %s164 = sadd.s32 %s163, 1
      %s165 = scalar_select %p162, %s163, %s164
      %p168 = pneg %p162
      %p169 = scmp.eq.s32.totalorder %s17, 1
      %p170 = por %p168, %p169
      %p171 = scmp.ne.s32.totalorder %s163, %s166
      %p172 = scmp.eq.s32.totalorder %s17, 0
      %p173 = por %p171, %p172
      %p174 = scmp.ne.s32.totalorder %s163, %s166
      %p175 = scmp.eq.s32.totalorder %s22, 1
      %p176 = por %p174, %p175
      %p177 = scmp.ne.s32.totalorder %s166, %s167
      %p178 = scmp.eq.s32.totalorder %s22, 0
      %p179 = por %p177, %p178
      %p180 = scmp.ne.s32.totalorder %s166, %s167
      %p181 = scmp.eq.s32.totalorder %s23, 1
      %p182 = por %p180, %p181
      %p184 = scmp.ne.s32.totalorder %s167, %s183
      %p185 = scmp.eq.s32.totalorder %s23, 0
      %p186 = por %p184, %p185
      %p187 = scmp.le.s32.totalorder 1, %s17
      %p188 = scmp.lt.s32.totalorder %s17, 3
      %p189 = pnand %p187, %p188
      %p190 = pneg %p189
      // Predicated region
      $region9: #{tpu_custom_call.1} parent=5 // pred_check
        _
      $region10: #{tpu_custom_call.1} parent=5 // pred_check_branch
        %192 = sbr.rel (%p189) target = $region12
      $region11: #{tpu_custom_call.1} parent=5 // pred_region
        %s193 = ssub.s32 %s17, 1
        // Predicated region
        $region13: #{tpu_custom_call.1} parent=11 // pred_check
          %p194 = pneg %p132
        $region14: #{tpu_custom_call.1} parent=11 // pred_check_branch
          %196 = sbr.rel (%p194) target = $region16
        $region15: #{tpu_custom_call.1} parent=11 // pred_region
          _
        $region16: #{tpu_custom_call.1} parent=11 // pred_fallthru
          _
        // Predicated region
        $region17: #{tpu_custom_call.1} parent=11 // pred_check
          %p197 = pneg %p153
        $region18: #{tpu_custom_call.1} parent=11 // pred_check_branch
          %199 = sbr.rel (%p197) target = $region20
        $region19: #{tpu_custom_call.1} parent=11 // pred_region
          _
        $region20: #{tpu_custom_call.1} parent=11 // pred_fallthru
          _
      $region12: #{tpu_custom_call.1} parent=5 // pred_fallthru
        _
      %p200 = scmp.lt.s32.totalorder %s17, 2
      // Predicated region
      $region21: #{tpu_custom_call.1} parent=5 // pred_check
        %p201 = pneg %p200
      $region22: #{tpu_custom_call.1} parent=5 // pred_check_branch
        %203 = sbr.rel (%p201) target = $region24
      $region23: #{tpu_custom_call.1} parent=5 // pred_region
        // Predicated region
        $region25: #{tpu_custom_call.1} parent=23 // pred_check
          %p204 = pneg %p51
        $region26: #{tpu_custom_call.1} parent=23 // pred_check_branch
          %206 = sbr.rel (%p204) target = $region28
        $region27: #{tpu_custom_call.1} parent=23 // pred_region
          %s207 = sand.u32 %s41, 1
          %s208 = scalar_lea.sflag [#allocation6], %s207
          %s209 = sand.u32 %s41, 1
          %s210 = smul.addr %s209, 32
          %s211 = scalar_lea.vmem [#allocation5], %s210
          %s212 = smul.u32 2, %s25
          %s214 = ssub.s32 512, 512
          %215 = vsyncadd %s208, %s214
          %s216 = smul.addr %s212, 2
          %s217 = smul.addr %s24, 4
          %s218 = sadd.s32 %s216, %s217
          %s219 = smul.addr %s218, 128
          %s220 = scalar_lea.hbm %s0, %s219
          %s221 = sshll.u32 %s211, 4
          %s222 = int_to_ptr.vmem [resolvable:$true] %s221
          %227 = dma.hbm_to_vmem [thread:$0]  %s220, 512, %s222, %s208, 256, 256, 16
        $region28: #{tpu_custom_call.1} parent=23 // pred_fallthru
          _
        // Predicated region
        $region29: #{tpu_custom_call.1} parent=23 // pred_check
          %p228 = pneg %p79
        $region30: #{tpu_custom_call.1} parent=23 // pred_check_branch
          %230 = sbr.rel (%p228) target = $region32
        $region31: #{tpu_custom_call.1} parent=23 // pred_region
          %s231 = smul.u32 2, %s25
          %p232 = scmp.lt.s32.totalorder %s24, 1
          %s233 = scalar_select %p232, %s24, 1
          %p234 = scmp.lt.s32.totalorder %s231, 1
          %s235 = scalar_select %p234, %s231, 1
          %s236 = smul.addr %s233, 2
          %s237 = sadd.s32 %s235, %s236
          %s238 = smul.addr %s237, 8
          %s239 = scalar_lea.vmem %s1, %s238
          %s240 = smul.u32 2, %s25
        $region32: #{tpu_custom_call.1} parent=23 // pred_fallthru
          _
        // Predicated region
        $region33: #{tpu_custom_call.1} parent=23 // pred_check
          %p241 = pneg %p105
        $region34: #{tpu_custom_call.1} parent=23 // pred_check_branch
          %243 = sbr.rel (%p241) target = $region36
        $region35: #{tpu_custom_call.1} parent=23 // pred_region
          %p244 = scmp.lt.s32.totalorder %s24, 1
          %s245 = scalar_select %p244, %s24, 1
          %s246 = smul.addr %s245, 2
          %s247 = scalar_lea.vmem %s2, %s246
        $region36: #{tpu_custom_call.1} parent=23 // pred_fallthru
          _
      $region24: #{tpu_custom_call.1} parent=5 // pred_fallthru
        _
      %p248 = scmp.le.s32.totalorder 1, %s17
      %p249 = scmp.lt.s32.totalorder %s17, 3
      %p250 = pnand %p248, %p249
      %p251 = pneg %p250
      // Predicated region
      $region37: #{tpu_custom_call.1} parent=5 // pred_check
        _
      $region38: #{tpu_custom_call.1} parent=5 // pred_check_branch
        %253 = sbr.rel (%p250) target = $region40
      $region39: #{tpu_custom_call.1} parent=5 // pred_region
        %s254 = ssub.s32 %s17, 1
        %s255 = sand.u32 %s44, 1
        %s256 = scalar_lea.sflag [#allocation6], %s255
        %s257 = sand.u32 %s44, 1
        %s258 = smul.addr %s257, 32
        %s259 = scalar_lea.vmem [#allocation5], %s258
        // Predicated region
        $region41: #{tpu_custom_call.1} parent=39 // pred_check
          %p260 = pneg %p57
        $region42: #{tpu_custom_call.1} parent=39 // pred_check_branch
          %262 = sbr.rel (%p260) target = $region44
        $region43: #{tpu_custom_call.1} parent=39 // pred_region
          %263 = dma.done %s256, 512
        $region44: #{tpu_custom_call.1} parent=39 // pred_fallthru
          _
        %s264 = sand.u32 %s44, 1
        %s265 = scalar_lea.sflag [#allocation6], %s264
        %s266 = sand.u32 %s44, 1
        %s267 = smul.addr %s266, 32
        %s268 = scalar_lea.vmem [#allocation5], %s267
        %p269 = pneg %p57
        %p270 = pneg %p54
        %s271 = smul.u32 2, %s27
        %p272 = scmp.lt.s32.totalorder %s26, 1
        %s273 = scalar_select %p272, %s26, 1
        %p274 = scmp.lt.s32.totalorder %s271, 1
        %s275 = scalar_select %p274, %s271, 1
        %s276 = smul.addr %s273, 2
        %s277 = sadd.s32 %s275, %s276
        %s278 = smul.addr %s277, 8
        %s279 = scalar_lea.vmem %s1, %s278
        %p280 = pneg %p85
        %p281 = pneg %p82
        %p282 = scmp.lt.s32.totalorder %s26, 1
        %s283 = scalar_select %p282, %s26, 1
        %s284 = smul.addr %s283, 2
        %s285 = scalar_lea.vmem %s2, %s284
        %p286 = pneg %p111
        %p287 = pneg %p108
        %p288 = pneg %p132
        %p289 = pneg %p129
        %p290 = pneg %p153
        %p291 = pneg %p150
        %p292 = pneg %p179
        %p293 = pneg %p176
        %s294 = sand.u32 %s166, 1
        %s295 = scalar_lea.sflag [#allocation7], %s294
        %s296 = sand.u32 %s166, 1
        %s297 = smul.addr %s296, 2
        %s298 = scalar_lea.vmem [#allocation8], %s297
        %s299 = smul.u32 2, %s27
        %s300 = smul.u32 2, %s27
        %p301 = scmp.lt.s32.totalorder %s26, 1
        %s302 = scalar_select %p301, %s26, 1
        %p303 = scmp.lt.s32.totalorder %s300, 1
        %s304 = scalar_select %p303, %s300, 1
        %s305 = smul.addr %s302, 2
        %s306 = sadd.s32 %s304, %s305
        %s307 = smul.addr %s306, 8
        %s308 = scalar_lea.vmem %s1, %s307
        %s309 = smul.u32 2, %s27
        %p310 = scmp.lt.s32.totalorder %s26, 1
        %s311 = scalar_select %p310, %s26, 1
        %s312 = smul.addr %s311, 2
        %s313 = scalar_lea.vmem %s2, %s312
        %p314 = scmp.eq.s32.totalorder %s27, 0
        // Predicated region
        $region45: #{tpu_custom_call.1} parent=39 // pred_check
          %p315 = pneg %p314
        $region46: #{tpu_custom_call.1} parent=39 // pred_check_branch
          %317 = sbr.rel (%p315) target = $region48
        $region47: #{tpu_custom_call.1} parent=39 // pred_region
          %vm318 = vcmask 0
          %319 = vst.msk [vmem:[#allocation2] sm:$0x1] %vm318, -inf
          %320 = vst.msk [vmem:[#allocation3] sm:$0x1] %vm318, 0.0
          %v321 = vlaneseq
          %vm322 = vcmp.ge.s32.totalorder %v321, 0
          %vm323 = vcmp.lt.s32.totalorder %v321, 256
          %vm324 = vmand %vm322, %vm323
          %325 = vst.msk [vmem:[#allocation4] sm:$0x3] %vm324, 0.0
        $region48: #{tpu_custom_call.1} parent=39 // pred_fallthru
          _
        %v326 = vld [vmem:[%s259] sm:$0xff]
        %v327 = vld [vmem:[%s259 + $0x8] sm:$0xff]
        %v328 = vld [vmem:[%s259 + $0x10] sm:$0xff]
        %v329 = vld [vmem:[%s259 + $0x18] sm:$0xff]
        %v330 = vld [vmem:[%s308] sm:$0xff]
        %v331 = vld [vmem:[%s308 + $0x8] sm:$0xff]
        %v332 = vld [vmem:[%s3] sm:$0x3]
        %v333 = vld [vmem:[%s4] sm:$0x3]
        %v334 = vld [vmem:[%s313] sm:$0x3]
        %v335 = vmul.f32 %v334, %v333
        %v337 = vlaneseq
        %v338 = vshrl.u32 %v337, 7
        %v339 = vsub.s32 0, %v338
        %v340 = vrot.slane %v335, %v339
        %v341 = vlaneseq
        %v342 = vshrl.u32 %v341, 7
        %v343 = vsub.s32 1, %v342
        %v344 = vrot.slane %v335, %v343
        %vm347 = vcmask 1040384
        %v348 = vsel %vm347, %v340, 0.0
        %v349 = vsel %vm347, %v344, 0.0
        %v350 = vadd.f32 %v348, %v349
        %351 = vadd.xlane.f32.xlu0 %v350
        %v352 = vpop.xlane.xlu0 %351
        %v354 = vlaneseq
        %v355 = vshrl.u32 %v354, 7
        %v356 = vsub.s32 0, %v355
        %v357 = vrot.slane %v332, %v356
        %v358 = vlaneseq
        %v359 = vshrl.u32 %v358, 7
        %v360 = vsub.s32 1, %v359
        %v361 = vrot.slane %v332, %v360
        %v364 = vmul.f32 %v326, %v357
        %v365 = vmul.f32 %v327, %v361
        %v366 = vmul.f32 %v328, %v357
        %v367 = vmul.f32 %v329, %v361
        %v368 = vadd.f32 %v364, %v365
        %369 = vadd.xlane.f32.xlu0 %v368
        %v370 = vpop.xlane.xlu0 %369
        %v371 = vadd.f32 %v366, %v367
        %372 = vadd.xlane.f32.xlu0 %v371
        %v373 = vpop.xlane.xlu0 %372
        %v374 = vlaneseq
        %v375 = vshrl.u32 %v374, 7
        %v376 = vsub.s32 0, %v375
        %v377 = vrot.slane %v352, %v376
        %v378 = vadd.f32 %v370, %v377
        %v379 = vadd.f32 %v373, %v377
        %vm380 = vcmp.ge.f32.partialorder %v378, 0.0
        %vm381 = vcmp.ge.f32.partialorder %v379, 0.0
        %v382 = vmul.f32 %v378, 0.01
        %v383 = vmul.f32 %v379, 0.01
        %v384 = vsel %vm380, %v378, %v382
        %v385 = vsel %vm381, %v379, %v383
        %vm386 = vcmp.gt.f32.partialorder %v330, 0.0
        %vm387 = vcmp.gt.f32.partialorder %v331, 0.0
        %v388 = vsel %vm386, %v384, -1e+12
        %v389 = vsel %vm387, %v385, -1e+12
        %v390 = vld [vmem:[#allocation2] sm:$0x1]
        %vm391 = vcmask 7168
        %v392 = vsel %vm391, %v388, -inf
        %v393 = vsel %vm391, %v389, -inf
        %v394 = vmax.f32 %v392, %v393
        %v395 = vrot.slane %v394, 4
        %v396 = vmax.f32 %v394, %v395
        %v397 = vrot.slane %v396, 2
        %v398 = vmax.f32 %v396, %v397
        %v399 = vrot.slane %v398, 1
        %v400 = vmax.f32 %v398, %v399
        %v401 = vmax.f32 %v390, %v400
        %v402 = vsub.f32 %v390, %v401
        %v403 = vmul.f32 %v402, 1.442695
        %v404 = vpow.pop %v403
        %v406 = vlaneseq
        %v407 = vshrl.u32 %v406, 7
        %v408 = vsub.s32 0, %v407
        %v409 = vrot.slane %v401, %v408
        %v411 = vsub.f32 %v388, %v409
        %v412 = vsub.f32 %v389, %v409
        %v413 = vmul.f32 %v411, 1.442695
        %v414 = vpow.pop %v413
        %v415 = vmul.f32 %v412, 1.442695
        %v416 = vpow.pop %v415
        %v417 = vld [vmem:[#allocation3] sm:$0x1]
        %v418 = vmul.f32 %v404, %v417
        %v419 = vsel %vm391, %v414, 0.0
        %v420 = vsel %vm391, %v416, 0.0
        %v421 = vadd.f32 %v419, %v420
        %v422 = vrot.slane %v421, 4
        %v423 = vadd.f32 %v421, %v422
        %v424 = vrot.slane %v423, 2
        %v425 = vadd.f32 %v423, %v424
        %v426 = vrot.slane %v425, 1
        %v427 = vadd.f32 %v425, %v426
        %v428 = vadd.f32 %v418, %v427
        %vm429 = vcmask 0
        %430 = vst.msk [vmem:[#allocation3] sm:$0x1] %vm429, %v428
        %v431 = vld [vmem:[#allocation4] sm:$0x3]
        %433 = vset.pattern.permute.xlu0 0
        %434 = vperm.xlu0 %433, %v404
        %v435 = vpop.permute.xlu0 %434
        %v437 = vlaneseq
        %v438 = vshrl.u32 %v437, 7
        %v439 = vsub.s32 0, %v438
        %v440 = vrot.slane %v435, %v439
        %v441 = vmul.f32 %v440, %v431
        %443 = vset.pattern.permute.xlu0 0
        %444 = vperm.xlu0 %443, %v414
        %v445 = vpop.permute.xlu0 %444
        %448 = vset.pattern.permute.xlu0 0
        %449 = vperm.xlu0 %448, %v416
        %v450 = vpop.permute.xlu0 %449
        %v452 = vmul.f32 %v445, %v326
        %v453 = vmul.f32 %v445, %v327
        %v454 = vmul.f32 %v450, %v328
        %v455 = vmul.f32 %v450, %v329
        %v456 = vadd.f32 %v452, %v454
        %v457 = vrot.slane %v456, 4
        %v458 = vadd.f32 %v456, %v457
        %v459 = vrot.slane %v458, 2
        %v460 = vadd.f32 %v458, %v459
        %v461 = vrot.slane %v460, 1
        %v462 = vadd.f32 %v460, %v461
        %v463 = vadd.f32 %v453, %v455
        %v464 = vrot.slane %v463, 4
        %v465 = vadd.f32 %v463, %v464
        %v466 = vrot.slane %v465, 2
        %v467 = vadd.f32 %v465, %v466
        %v468 = vrot.slane %v467, 1
        %v469 = vadd.f32 %v467, %v468
        %v472 = vcombine.low %v462, %v469
        %v474 = vunpack.c.l.s4 1966171168
        %v475 = vunpack.c.0.s8 %v474
        %v476 = vlaneseq
        %v477 = vshrl.u32 %v476, 7
        %v478 = vsub.s32 %v475, %v477
        %v479 = vrot.slane %v472, %v478
        %v481 = vunpack.c.l.s4 1966171168
        %v482 = vunpack.c.0.s8 %v481
        %v483 = vlaneseq
        %v484 = vshrl.u32 %v483, 7
        %v485 = vsub.s32 %v482, %v484
        %v486 = vrot.slane %v479, %v485
        %v488 = vadd.f32 %v441, %v486
        %v489 = vlaneseq
        %vm490 = vcmp.ge.s32.totalorder %v489, 0
        %vm491 = vcmp.lt.s32.totalorder %v489, 256
        %vm492 = vmand %vm490, %vm491
        %493 = vst.msk [vmem:[#allocation4] sm:$0x3] %vm492, %v488
        %494 = vst.msk [vmem:[#allocation2] sm:$0x1] %vm429, %v401
        // Predicated region
        $region49: #{tpu_custom_call.1} parent=39 // pred_check
          %p495 = pneg %p314
        $region50: #{tpu_custom_call.1} parent=39 // pred_check_branch
          %497 = sbr.rel (%p495) target = $region52
        $region51: #{tpu_custom_call.1} parent=39 // pred_region
          %v498 = vld [vmem:[#allocation4] sm:$0x3]
          %v499 = vld [vmem:[#allocation3] sm:$0x1]
          %501 = vset.pattern.permute.xlu0 0
          %502 = vperm.xlu0 %501, %v499
          %v503 = vpop.permute.xlu0 %502
          %v505 = vlaneseq
          %v506 = vshrl.u32 %v505, 7
          %v507 = vsub.s32 0, %v506
          %v508 = vrot.slane %v503, %v507
          %v509 = vrcp.pop %v508
          %v510 = vmul.f32 %v498, %v509
          %511 = vst.msk [vmem:[%s298] sm:$0x3] %vm492, %v510
        $region52: #{tpu_custom_call.1} parent=39 // pred_fallthru
          _
        %s512 = sand.u32 %s166, 1
        %s513 = scalar_lea.sflag [#allocation7], %s512
        %s514 = sand.u32 %s166, 1
        %s515 = smul.addr %s514, 2
        %s516 = scalar_lea.vmem [#allocation8], %s515
        // Predicated region
        $region53: #{tpu_custom_call.1} parent=39 // pred_check
          %p517 = pneg %p176
        $region54: #{tpu_custom_call.1} parent=39 // pred_check_branch
          %519 = sbr.rel (%p517) target = $region56
        $region55: #{tpu_custom_call.1} parent=39 // pred_region
          %s521 = ssub.s32 32, 32
          %522 = vsyncadd %s513, %s521
          %s523 = smul.addr %s26, 2
          %s524 = smul.addr %s523, 16
          %s525 = scalar_lea.hbm %s5, %s524
          %s527 = sshll.u32 %s516, 4
          %s528 = int_to_ptr.vmem [resolvable:$true] %s527
          %530 = dma.vmem_to_hbm [thread:$0]  %s528, 32, %s525, %s513
        $region56: #{tpu_custom_call.1} parent=39 // pred_fallthru
          _
      $region40: #{tpu_custom_call.1} parent=5 // pred_fallthru
        _
      %p531 = scmp.le.s32.totalorder 2, %s17
      // Predicated region
      $region57: #{tpu_custom_call.1} parent=5 // pred_check
        %p532 = pneg %p531
      $region58: #{tpu_custom_call.1} parent=5 // pred_check_branch
        %534 = sbr.rel (%p532) target = $region60
      $region59: #{tpu_custom_call.1} parent=5 // pred_region
        %s535 = ssub.s32 %s17, 2
        // Predicated region
        $region61: #{tpu_custom_call.1} parent=59 // pred_check
          %p536 = pneg %p182
        $region62: #{tpu_custom_call.1} parent=59 // pred_check_branch
          %538 = sbr.rel (%p536) target = $region64
        $region63: #{tpu_custom_call.1} parent=59 // pred_region
          %s539 = sand.u32 %s167, 1
          %s540 = scalar_lea.sflag [#allocation7], %s539
          %s541 = sand.u32 %s167, 1
          %s542 = smul.addr %s541, 2
          %s543 = scalar_lea.vmem [#allocation8], %s542
          %544 = dma.done %s540, 32
        $region64: #{tpu_custom_call.1} parent=59 // pred_fallthru
          _
      $region60: #{tpu_custom_call.1} parent=5 // pred_fallthru
        _
    $region6: #{tpu_custom_call.1} parent=1 // loop_footer
      %s21 = sadd.s32 1, %s17
    $region7: #{tpu_custom_call.1} parent=1 // loop_footer_branch
      %16 = sbr.rel target = $region3
    $region8: #{tpu_custom_call.1} parent=1 // loop_exit
      _
    %545 = vsyncpa [#allocation6], 1
    %s546 = scalar_lea.sflag [#allocation6], 1
    %547 = vsyncpa %s546, 1
    %548 = vsyncpa [#allocation7], 1
    %s549 = scalar_lea.sflag [#allocation7], 1
    %550 = vsyncpa %s549, 1

</llo_original>
